<compile_context>
chip_gen: v6e
topology: v6e:2x2x1
jax: 0.10.0
libtpu: 0.0.40
codegen_flags: <defaults>
</compile_context>

<pallas_src>
import numpy as np
import jax
import jax.numpy as jnp
from jax import lax
from jax.experimental import pallas as pl
from jax.experimental.pallas import tpu as pltpu


# ---------------------------------------------------------------------------
# Kernel: per (sample, pixel-tile) inner model + (pre-folded) CFG bias + mask blend
# ---------------------------------------------------------------------------
def _make_kernel(with_mask):
    """Refs per grid step (b, p):
         cskip_ref [B]            SMEM   1/(sigma^2+1) per sample
         x_ref     (1, C,  TP)    bf16   un-duplicated latent tile
         ic_ref    (1, Cc, TP)    bf16   un-duplicated image_cond tile
         wx_ref    (C, C)         f32    1x1-conv weight on x channels
         wic_ref   (C, Cc)        f32    1x1-conv weight on image_cond channels
         bias_ref  (1, C, 1)      f32    CFG-folded cond bias for this sample
         (mask)    init_ref (1, C, TP) bf16, mask_ref (1, 1, TP) f32
         o_ref     (1, C, TP)     f32
    """
    def kernel(*refs):
        if with_mask:
            cskip_ref, x_ref, ic_ref, wx_ref, wic_ref, bias_ref, init_ref, mask_ref, o_ref = refs
        else:
            cskip_ref, x_ref, ic_ref, wx_ref, wic_ref, bias_ref, o_ref = refs

        b = pl.program_id(0)
        x_t = x_ref[0].astype(jnp.float32)            # (C,  TP)  exact upcast
        ic_t = ic_ref[0].astype(jnp.float32)          # (Cc, TP)

        # Synthetic inner model: channel mix + sigma skip + pooled-cond bias
        conv = (jnp.dot(wx_ref[...], x_t, preferred_element_type=jnp.float32)
                + jnp.dot(wic_ref[...], ic_t, preferred_element_type=jnp.float32))
        den = x_t * cskip_ref[b] + conv + bias_ref[0]  # bias (C,1) broadcasts over lanes

        if with_mask:
            m = mask_ref[0]                            # (1, TP), broadcasts over channels
            den = init_ref[0].astype(jnp.float32) * m + (1.0 - m) * den

        o_ref[0] = den.astype(o_ref.dtype)

    return kernel


def _pick_tile_p(P, target=2048):
    """Largest multiple of 128 that divides P and is <= target (falls back to full P)."""
    if P % 128 != 0:
        return P            # correct, but stores become lane-masked for odd resolutions
    best, t, limit = 128, 128, min(P, target)
    while t <= limit:
        if P % t == 0:
            best = t
        t += 128
    return best


# ---------------------------------------------------------------------------
# Wrapper reproducing CFGDenoiser.forward (batch_cond_uncond, equal-seq-len path)
# ---------------------------------------------------------------------------
# TODO(synk): state.interrupted / state.skipped, prompt_parser.reconstruct_*_batch, the
#             self.step counter, and the unequal-seq-len / batch_cond_uncond=False chunked
#             loops are host-side control flow with no Pallas equivalent.
def cfg_denoiser_forward(x, sigma, uncond, tensor, conds_list, cond_scale,
                         image_cond, params, mask=None, nmask=None, init_latent=None,
                         stream_dtype=jnp.bfloat16, tile_p_target=2048):
    B, C, H, W = x.shape
    P = H * W
    Cc = image_cond.shape[1]
    repeats = [len(c) for c in conds_list]
    n_cond = sum(repeats)
    with_mask = mask is not None

    # ---- hoisted pooled cross-attn projection -> per-slot bias [N, C] (tiny, plain JAX) ----
    cond_in = jnp.concatenate([tensor, uncond], axis=0).astype(jnp.float32)     # [N, T, D]
    pooled = jnp.mean(cond_in, axis=1)                                          # [N, D]
    proj = jnp.einsum("nd,cd->nc", pooled, params["W_cond"].astype(jnp.float32),
                      precision=lax.Precision.HIGHEST)                          # [N, C]

    # ---- CFG weighted combine folded to a per-sample bias column (pixel independent) ----
    # Valid because each cond slot idx of sample i is a duplicate of (x[i], sigma[i],
    # image_cond[i]):  x_out[idx] - denoised_uncond[i] == proj[idx] - proj[n_cond+i].
    offsets = np.cumsum([0] + repeats)
    scale = jnp.asarray(cond_scale, jnp.float32)
    bias_rows = []
    for i in range(B):
        bu = proj[n_cond + i]
        acc = bu
        for idx, w in conds_list[i]:
            assert offsets[i] <= int(idx) < offsets[i + 1], \
                "cond index must point into its own sample's duplicated slots"
            acc = acc + (proj[int(idx)] - bu) * (jnp.asarray(w, jnp.float32) * scale)
        bias_rows.append(acc)
    bias = jnp.stack(bias_rows, axis=0).reshape(B, C, 1)                        # [B, C, 1] f32

    # ---- un-duplicated streams (bf16 halves HBM bytes; kernel upcasts to f32) ----
    x_s = x.reshape(B, C, P).astype(stream_dtype)
    ic_s = image_cond.reshape(B, Cc, P).astype(stream_dtype)
    wx = params["W_x"].astype(jnp.float32)                                      # [C, C]
    wic = params["W_ic"].astype(jnp.float32)                                    # [C, Cc]
    cskip = 1.0 / (sigma.astype(jnp.float32) ** 2 + 1.0)                        # [B] -> SMEM

    TILE_P = _pick_tile_p(P, tile_p_target)
    grid = (B, P // TILE_P)

    in_specs = [
        pl.BlockSpec(memory_space=pltpu.MemorySpace.SMEM),            # cskip (whole, SMEM)
        pl.BlockSpec((1, C, TILE_P), lambda b, p: (b, 0, p)),         # x
        pl.BlockSpec((1, Cc, TILE_P), lambda b, p: (b, 0, p)),        # image_cond
        pl.BlockSpec((C, C), lambda b, p: (0, 0)),                    # W_x
        pl.BlockSpec((C, Cc), lambda b, p: (0, 0)),                   # W_ic
        pl.BlockSpec((1, C, 1), lambda b, p: (b, 0, 0)),              # folded CFG bias
    ]
    inputs = [cskip, x_s, ic_s, wx, wic, bias]

    if with_mask:
        # TODO(synk): the kernel assumes nmask == 1 - mask (the A1111 invariant); nmask itself
        #             is not streamed, saving a [B, 1, P] HBM read.
        mask_s = jnp.broadcast_to(mask.astype(jnp.float32), (B, 1, H, W)).reshape(B, 1, P)
        init_s = init_latent.reshape(B, C, P).astype(stream_dtype)
        in_specs += [
            pl.BlockSpec((1, C, TILE_P), lambda b, p: (b, 0, p)),     # init_latent
            pl.BlockSpec((1, 1, TILE_P), lambda b, p: (b, 0, p)),     # mask
        ]
        inputs += [init_s, mask_s]

    out = pl.pallas_call(
        _make_kernel(with_mask),
        out_shape=jax.ShapeDtypeStruct((B, C, P), jnp.float32),
        grid=grid,
        in_specs=in_specs,
        out_specs=pl.BlockSpec((1, C, TILE_P), lambda b, p: (b, 0, p)),
        compiler_params=pltpu.CompilerParams(
            dimension_semantics=("parallel", "parallel")),
    )(*inputs)

    return out.reshape(B, C, H, W)


# ---------------------------------------------------------------------------
# Pure numpy reference (mirrors the PyTorch forward: full duplication + CFG loop)
# ---------------------------------------------------------------------------
def reference_forward(x, sigma, uncond, tensor, conds_list, cond_scale,
                      image_cond, params, mask, nmask, init_latent):
    B = x.shape[0]
    repeats = [len(c) for c in conds_list]
    x_in = np.concatenate([np.repeat(x[i:i + 1], n, axis=0)
                           for i, n in enumerate(repeats)] + [x], axis=0)
    ic_in = np.concatenate([np.repeat(image_cond[i:i + 1], n, axis=0)
                            for i, n in enumerate(repeats)] + [image_cond], axis=0)
    sigma_in = np.concatenate([np.repeat(sigma[i:i + 1], n, axis=0)
                               for i, n in enumerate(repeats)] + [sigma], axis=0)
    cond_in = np.concatenate([tensor, uncond], axis=0)

    W_x, W_ic, W_cond = params["W_x"], params["W_ic"], params["W_cond"]
    conv = np.einsum("oc,nchw->nohw", W_x, x_in) + np.einsum("oc,nchw->nohw", W_ic, ic_in)
    pooled = cond_in.mean(axis=1)
    proj = pooled @ W_cond.T
    c_skip = 1.0 / (sigma_in ** 2 + 1.0)
    x_out = x_in * c_skip[:, None, None, None] + conv + proj[:, :, None, None]

    du = x_out[-B:]
    den = du.copy()
    for i, conds in enumerate(conds_list):
        for idx, w in conds:
            den[i] = den[i] + (x_out[idx] - du[i]) * (w * cond_scale)
    if mask is not None:
        den = init_latent * mask + nmask * den
    return den


if __name__ == "__main__":
    B, C, H, W = 2, 4, 16, 16
    Cc, T, D = 4, 8, 32
    cond_scale = 7.0
    # prompt_parser.reconstruct_multicond_batch result (synthetic, deterministic):
    # batch item 0 has two weighted conds (AND prompt), item 1 has one.
    conds_list = [[(0, 0.7), (1, 0.3)], [(2, 1.0)]]
    n_cond = sum(len(c) for c in conds_list)

    key = jax.random.PRNGKey(0)
    ks = jax.random.split(key, 10)
    x = jax.random.normal(ks[0], (B, C, H, W), jnp.float32)
    image_cond = jax.random.normal(ks[1], (B, Cc, H, W), jnp.float32)
    sigma = jnp.array([1.5, 2.0], jnp.float32)
    tensor = jax.random.normal(ks[2], (n_cond, T, D), jnp.float32)   # multicond embeddings
    uncond = jax.random.normal(ks[3], (B, T, D), jnp.float32)
    params = {
        "W_x": 0.1 * jax.random.normal(ks[4], (C, C), jnp.float32),
        "W_ic": 0.1 * jax.random.normal(ks[5], (C, Cc), jnp.float32),
        "W_cond": 0.1 * jax.random.normal(ks[6], (C, D), jnp.float32),
    }
    mask = (jax.random.uniform(ks[7], (B, 1, H, W)) > 0.5).astype(jnp.float32)
    nmask = 1.0 - mask
    init_latent = jax.random.normal(ks[8], (B, C, H, W), jnp.float32)

    # inpaint (mask) path and common no-inpaint path (specialized kernel without mask inputs)
    out_masked = cfg_denoiser_forward(x, sigma, uncond, tensor, conds_list, cond_scale,
                                      image_cond, params, mask=mask, nmask=nmask,
                                      init_latent=init_latent)
    out_plain = cfg_denoiser_forward(x, sigma, uncond, tensor, conds_list, cond_scale,
                                     image_cond, params)
    out_masked, out_plain = jax.block_until_ready((out_masked, out_plain))

    np_params = {k: np.asarray(v) for k, v in params.items()}

    def q16(a):  # bf16 round-trip matching the kernel's HBM stream precision
        return np.asarray(jnp.asarray(a).astype(jnp.bfloat16).astype(jnp.float32))

    # Strict check: reference fed the same bf16-quantized streams the kernel reads.
    ref_plain_q = reference_forward(q16(x), np.asarray(sigma), np.asarray(uncond),
                                    np.asarray(tensor), conds_list, cond_scale,
                                    q16(image_cond), np_params, None, None, None)
    ref_masked_q = reference_forward(q16(x), np.asarray(sigma), np.asarray(uncond),
                                     np.asarray(tensor), conds_list, cond_scale,
                                     q16(image_cond), np_params,
                                     np.broadcast_to(np.asarray(mask), x.shape),
                                     np.broadcast_to(np.asarray(nmask), x.shape),
                                     q16(init_latent))
    np.testing.assert_allclose(np.asarray(out_plain), ref_plain_q, rtol=1e-4, atol=1e-4)
    np.testing.assert_allclose(np.asarray(out_masked), ref_masked_q, rtol=1e-4, atol=1e-4)

    # Loose fidelity check vs the full-f32 reference (difference = intentional bf16 streaming).
    ref_plain = reference_forward(np.asarray(x), np.asarray(sigma), np.asarray(uncond),
                                  np.asarray(tensor), conds_list, cond_scale,
                                  np.asarray(image_cond), np_params, None, None, None)
    ref_masked = reference_forward(np.asarray(x), np.asarray(sigma), np.asarray(uncond),
                                   np.asarray(tensor), conds_list, cond_scale,
                                   np.asarray(image_cond), np_params,
                                   np.broadcast_to(np.asarray(mask), x.shape),
                                   np.broadcast_to(np.asarray(nmask), x.shape),
                                   np.asarray(init_latent))
    np.testing.assert_allclose(np.asarray(out_plain), ref_plain, rtol=2e-2, atol=5e-2)
    np.testing.assert_allclose(np.asarray(out_masked), ref_masked, rtol=2e-2, atol=5e-2)
    print("KERNEL_OK")
</pallas_src>

<mosaic_0001>
module attributes {stable_mosaic.version = 11 : i64} {
  func.func @kernel(%arg0: i32, %arg1: i32, %arg2: memref<2xf32, #tpu.memory_space<smem>>, %arg3: memref<1x4x256xbf16, #tpu.memory_space<vmem>>, %arg4: memref<1x4x256xbf16, #tpu.memory_space<vmem>>, %arg5: memref<4x4xf32, #tpu.memory_space<vmem>>, %arg6: memref<4x4xf32, #tpu.memory_space<vmem>>, %arg7: memref<1x4x1xf32, #tpu.memory_space<vmem>>, %arg8: memref<1x4x256xbf16, #tpu.memory_space<vmem>>, %arg9: memref<1x1x256xf32, #tpu.memory_space<vmem>>, %arg10: memref<1x4x256xf32, #tpu.memory_space<vmem>>) attributes {dimension_semantics = [#tpu.dimension_semantics<parallel>, #tpu.dimension_semantics<parallel>], iteration_bounds = array<i64: 2, 1>, scalar_prefetch = 0 : i64, scratch_operands = 0 : i64, tpu.core_type = #tpu.core_type<tc>, window_params = [{transform_indices = @transform_0, window_bounds = array<i64: 2>}, {transform_indices = @transform_1, window_bounds = array<i64: 1, 4, 256>}, {transform_indices = @transform_2, window_bounds = array<i64: 1, 4, 256>}, {pipeline_mode = #tpu.pipeline_mode<synchronous>, transform_indices = @transform_3, window_bounds = array<i64: 4, 4>}, {pipeline_mode = #tpu.pipeline_mode<synchronous>, transform_indices = @transform_4, window_bounds = array<i64: 4, 4>}, {transform_indices = @transform_5, window_bounds = array<i64: 1, 4, 1>}, {transform_indices = @transform_6, window_bounds = array<i64: 1, 4, 256>}, {transform_indices = @transform_7, window_bounds = array<i64: 1, 1, 256>}, {transform_indices = @transform_8, window_bounds = array<i64: 1, 4, 256>}]} {
    %c0 = arith.constant 0 : index
    %c0_0 = arith.constant 0 : index
    %c0_1 = arith.constant 0 : index
    %0 = vector.load %arg3[%c0, %c0_0, %c0_1] : memref<1x4x256xbf16, #tpu.memory_space<vmem>>, vector<1x4x256xbf16>
    %1 = vector.shape_cast %0 : vector<1x4x256xbf16> to vector<4x256xbf16>
    %2 = arith.extf %1 : vector<4x256xbf16> to vector<4x256xf32>
    %c0_2 = arith.constant 0 : index
    %c0_3 = arith.constant 0 : index
    %c0_4 = arith.constant 0 : index
    %3 = vector.load %arg4[%c0_2, %c0_3, %c0_4] : memref<1x4x256xbf16, #tpu.memory_space<vmem>>, vector<1x4x256xbf16>
    %4 = vector.shape_cast %3 : vector<1x4x256xbf16> to vector<4x256xbf16>
    %5 = arith.extf %4 : vector<4x256xbf16> to vector<4x256xf32>
    %c0_5 = arith.constant 0 : index
    %c0_6 = arith.constant 0 : index
    %6 = vector.load %arg5[%c0_5, %c0_6] : memref<4x4xf32, #tpu.memory_space<vmem>>, vector<4x4xf32>
    %cst = arith.constant dense<0.000000e+00> : vector<4x256xf32>
    %7 = tpu.matmul %6, %2, %cst {dimension_numbers = #tpu.dot_dimension_numbers<[1], [0], [0], [1], [0, 0, 1, 1], [], []>} : vector<4x4xf32>, vector<4x256xf32>, vector<4x256xf32> -> vector<4x256xf32>
    %c0_7 = arith.constant 0 : index
    %c0_8 = arith.constant 0 : index
    %8 = vector.load %arg6[%c0_7, %c0_8] : memref<4x4xf32, #tpu.memory_space<vmem>>, vector<4x4xf32>
    %cst_9 = arith.constant dense<0.000000e+00> : vector<4x256xf32>
    %9 = tpu.matmul %8, %5, %cst_9 {dimension_numbers = #tpu.dot_dimension_numbers<[1], [0], [0], [1], [0, 0, 1, 1], [], []>} : vector<4x4xf32>, vector<4x256xf32>, vector<4x256xf32> -> vector<4x256xf32>
    %10 = arith.addf %7, %9 : vector<4x256xf32>
    %11 = arith.index_cast %arg0 : i32 to index
    %12 = memref.load %arg2[%11] : memref<2xf32, #tpu.memory_space<smem>>
    %13 = vector.broadcast %12 : f32 to vector<4x256xf32>
    %14 = arith.mulf %2, %13 : vector<4x256xf32>
    %15 = arith.addf %14, %10 : vector<4x256xf32>
    %c0_10 = arith.constant 0 : index
    %c0_11 = arith.constant 0 : index
    %c0_12 = arith.constant 0 : index
    %16 = vector.load %arg7[%c0_10, %c0_11, %c0_12] : memref<1x4x1xf32, #tpu.memory_space<vmem>>, vector<1x4x1xf32>
    %17 = vector.shape_cast %16 : vector<1x4x1xf32> to vector<4x1xf32>
    %18 = vector.broadcast %17 : vector<4x1xf32> to vector<4x256xf32>
    %19 = arith.addf %15, %18 : vector<4x256xf32>
    %c0_13 = arith.constant 0 : index
    %c0_14 = arith.constant 0 : index
    %c0_15 = arith.constant 0 : index
    %20 = vector.load %arg9[%c0_13, %c0_14, %c0_15] : memref<1x1x256xf32, #tpu.memory_space<vmem>>, vector<1x1x256xf32>
    %21 = vector.shape_cast %20 : vector<1x1x256xf32> to vector<1x256xf32>
    %c0_16 = arith.constant 0 : index
    %c0_17 = arith.constant 0 : index
    %c0_18 = arith.constant 0 : index
    %22 = vector.load %arg8[%c0_16, %c0_17, %c0_18] : memref<1x4x256xbf16, #tpu.memory_space<vmem>>, vector<1x4x256xbf16>
    %23 = vector.shape_cast %22 : vector<1x4x256xbf16> to vector<4x256xbf16>
    %24 = arith.extf %23 : vector<4x256xbf16> to vector<4x256xf32>
    %25 = vector.broadcast %21 : vector<1x256xf32> to vector<4x256xf32>
    %26 = arith.mulf %24, %25 : vector<4x256xf32>
    %cst_19 = arith.constant 1.000000e+00 : f32
    %27 = vector.broadcast %cst_19 : f32 to vector<1x256xf32>
    %28 = arith.subf %27, %21 : vector<1x256xf32>
    %29 = vector.broadcast %28 : vector<1x256xf32> to vector<4x256xf32>
    %30 = arith.mulf %29, %19 : vector<4x256xf32>
    %31 = arith.addf %26, %30 : vector<4x256xf32>
    %c0_20 = arith.constant 0 : index
    %c0_21 = arith.constant 0 : index
    %c0_22 = arith.constant 0 : index
    %32 = vector.load %arg10[%c0_20, %c0_21, %c0_22] : memref<1x4x256xf32, #tpu.memory_space<vmem>>, vector<1x4x256xf32>
    %33 = vector.shape_cast %32 : vector<1x4x256xf32> to vector<4x256xf32>
    %34 = vector.shape_cast %31 : vector<4x256xf32> to vector<1x4x256xf32>
    tpu.vector_store %arg10[%c0_20, %c0_21, %c0_22], %34 {strides = array<i32>} : memref<1x4x256xf32, #tpu.memory_space<vmem>>, vector<1x4x256xf32>,
    return
  }
  func.func @transform_0(%arg0: i32, %arg1: i32) -> i32 {
    %c0_i32 = arith.constant 0 : i32
    %c0_i32_0 = arith.constant 0 : i32
    return %c0_i32 : i32
  }
  func.func @transform_1(%arg0: i32, %arg1: i32) -> (i32, i32, i32) {
    %c0_i32 = arith.constant 0 : i32
    %c0_i32_0 = arith.constant 0 : i32
    return %arg0, %c0_i32, %arg1 : i32, i32, i32
  }
  func.func @transform_2(%arg0: i32, %arg1: i32) -> (i32, i32, i32) {
    %c0_i32 = arith.constant 0 : i32
    %c0_i32_0 = arith.constant 0 : i32
    return %arg0, %c0_i32, %arg1 : i32, i32, i32
  }
  func.func @transform_3(%arg0: i32, %arg1: i32) -> (i32, i32) {
    %c0_i32 = arith.constant 0 : i32
    %c0_i32_0 = arith.constant 0 : i32
    %c0_i32_1 = arith.constant 0 : i32
    return %c0_i32, %c0_i32_0 : i32, i32
  }
  func.func @transform_4(%arg0: i32, %arg1: i32) -> (i32, i32) {
    %c0_i32 = arith.constant 0 : i32
    %c0_i32_0 = arith.constant 0 : i32
    %c0_i32_1 = arith.constant 0 : i32
    return %c0_i32, %c0_i32_0 : i32, i32
  }
  func.func @transform_5(%arg0: i32, %arg1: i32) -> (i32, i32, i32) {
    %c0_i32 = arith.constant 0 : i32
    %c0_i32_0 = arith.constant 0 : i32
    %c0_i32_1 = arith.constant 0 : i32
    return %arg0, %c0_i32, %c0_i32_0 : i32, i32, i32
  }
  func.func @transform_6(%arg0: i32, %arg1: i32) -> (i32, i32, i32) {
    %c0_i32 = arith.constant 0 : i32
    %c0_i32_0 = arith.constant 0 : i32
    return %arg0, %c0_i32, %arg1 : i32, i32, i32
  }
  func.func @transform_7(%arg0: i32, %arg1: i32) -> (i32, i32, i32) {
    %c0_i32 = arith.constant 0 : i32
    %c0_i32_0 = arith.constant 0 : i32
    return %arg0, %c0_i32, %arg1 : i32, i32, i32
  }
  func.func @transform_8(%arg0: i32, %arg1: i32) -> (i32, i32, i32) {
    %c0_i32 = arith.constant 0 : i32
    %c0_i32_0 = arith.constant 0 : i32
    return %arg0, %c0_i32, %arg1 : i32, i32, i32
  }
}

</mosaic_0001>

<llo_original>
// kernel: tpu_custom_call.1
$region0: #{tpu_custom_call.1}
  #allocation0 [shape = 'u32[]', space=smem, size = 0x4, offset = 0x4, fixed_abs, tag = 'smem constant byte address 0x4 - core index']
  #allocation1 [shape = 'u32[144,128]{1,0:T(1,128)}', space=vmem, size = 0x12000, scoped, tag = 'internal scratch']
  %s0 = inlined_call_operand.hbm [shape: f32[2], index: 0, kind: input, shape index: {}]
  %s1 = inlined_call_operand.vmem [shape: bf16[2,4,256], index: 1, kind: input, shape index: {}]
  %s2 = inlined_call_operand.hbm [shape: bf16[2,4,256], index: 2, kind: input, shape index: {}]
  %s3 = inlined_call_operand.hbm [shape: f32[4,4], index: 3, kind: input, shape index: {}]
  %s4 = inlined_call_operand.hbm [shape: f32[4,4], index: 4, kind: input, shape index: {}]
  %s5 = inlined_call_operand.vmem [shape: f32[2,4,1], index: 5, kind: input, shape index: {}]
  %s6 = inlined_call_operand.vmem [shape: bf16[2,4,256], index: 6, kind: input, shape index: {}]
  %s7 = inlined_call_operand.vmem [shape: f32[2,1,256], index: 7, kind: input, shape index: {}]
  %s8 = inlined_call_operand.hbm [shape: f32[2,4,256], index: 8, kind: output, shape index: {}]
  %s9 = sld [smem:[#allocation0]]
  $region81: #{tpu_custom_call.1} parent=0
    _
  %s11 = ssub.s32 1, %s9
  %s12 = scalar_select 0, %s11, %s9
  $region1: #{tpu_custom_call.1} parent=0
    #allocation2 [shape = 'u8[512]{0}', space=smem, size = 0x200, scoped, tag = 'input window, operand 0, single buffered']
    #allocation3 [shape = 's32[2]{0}', space=sflag, size = 0x8, scoped, tag = 'scoped memory for tpu_custom_call.1']
    #allocation4 [shape = 's32[2]{0}', space=sflag, size = 0x8, scoped, tag = 'scoped memory for tpu_custom_call.1']
    #allocation5 [shape = 's32[2]{0}', space=sflag, size = 0x8, scoped, tag = 'scoped memory for tpu_custom_call.1']
    #allocation6 [shape = 'u8[4096]{0}', space=vmem, size = 0x1000, scoped, tag = 'input window, operand 2']
    #allocation7 [shape = 'u8[2048]{0}', space=vmem, size = 0x800, scoped, tag = 'input window, operand 3, single buffered']
    #allocation8 [shape = 's32[1]{0}', space=sflag, size = 0x4, scoped, tag = 'scoped memory for tpu_custom_call.1']
    #allocation9 [shape = 'u8[2048]{0}', space=vmem, size = 0x800, scoped, tag = 'input window, operand 4, single buffered']
    #allocation10 [shape = 'u8[8192]{0}', space=vmem, size = 0x2000, scoped, tag = 'output window, operand 0']
    %13 = vsyncpa [#allocation5], 0
    %14 = vsyncpa [#allocation3], 0
    %s15 = scalar_lea.sflag [#allocation3], 1
    %16 = vsyncpa %s15, 0
    %17 = vsyncpa [#allocation8], 0
    %18 = vsyncpa [#allocation4], 0
    %s19 = scalar_lea.sflag [#allocation4], 1
    %20 = vsyncpa %s19, 0
    loop: start=0, step=1, limit=4
    $region2: #{tpu_custom_call.1} parent=1 // loop_pre_header
      _
    $region3: #{tpu_custom_call.1} parent=1 // loop_header
      %s22 = sphi 0, %s26
      %p23 = scmp.ge.s32.totalorder %s22, 4
      %s29 = sphi 0, %s41
      %s30 = sphi 0, %s37
      %s31 = sphi 0, %s29
      %s32 = sphi 0, %s30
      %s33 = sphi 0, %s31
      %s34 = sphi 0, %s32
      %s42 = sphi 0, %s42
      %s44 = sphi 0, %s42
      %s45 = sphi 0, %s44
      %s59 = sphi 0, %s45
      %s67 = sphi 0, %s69
      %s70 = sphi 0, %s67
      %s71 = sphi 0, %s70
      %s87 = sphi 0, %s71
      %s95 = sphi 0, %s97
      %s98 = sphi 0, %s95
      %s99 = sphi 0, %s98
      %s115 = sphi 0, %s99
      %s119 = sphi 0, %s119
      %s121 = sphi 0, %s119
      %s122 = sphi 0, %s121
      %s136 = sphi 0, %s122
      %s140 = sphi 0, %s140
      %s142 = sphi 0, %s140
      %s143 = sphi 0, %s142
      %s157 = sphi 0, %s143
      %s163 = sphi 0, %s165
      %s166 = sphi 0, %s163
      %s167 = sphi 0, %s166
      %s183 = sphi 0, %s167
      %s191 = sphi 0, %s193
      %s194 = sphi 0, %s191
      %s195 = sphi 0, %s194
      %s211 = sphi 0, %s195
      %s219 = sphi 0, %s221
      %s222 = sphi 0, %s219
      %s223 = sphi 0, %s222
      %s239 = sphi 0, %s223
      %s247 = sphi 0, %s249
      %s250 = sphi 0, %s247
      %s251 = sphi 0, %s250
      %s267 = sphi 0, %s251
    $region4: #{tpu_custom_call.1} parent=1 // loop_header_branch
      %25 = sbr.rel (%p23) target = $region8
    $region5: #{tpu_custom_call.1} parent=1 // loop_body
      %s27 = ssub.s32 %s22, 1
      %s28 = ssub.s32 %s22, 2
      %s35 = sadd.s32 1, %s30
      %p36 = scmp.ge.s32.totalorder %s35, 1
      %s37 = scalar_select %p36, 0, %s35
      %s38 = sadd.s32 1, %s29
      %s39 = scalar_select %p36, %s38, %s29
      %p40 = scmp.ge.s32.totalorder %s39, 2
      %s41 = scalar_select %p40, 0, %s39
      %s43 = sadd.s32 %s42, 1
      %p46 = scmp.eq.s32.totalorder %s22, 1
      %p47 = scmp.ne.s32.totalorder %s42, %s44
      %p48 = scmp.eq.s32.totalorder %s22, 0
      %p49 = por %p47, %p48
      %p50 = scmp.ne.s32.totalorder %s42, %s44
      %p51 = scmp.eq.s32.totalorder %s27, 1
      %p52 = por %p50, %p51
      %p53 = scmp.ne.s32.totalorder %s44, %s45
      %p54 = scmp.eq.s32.totalorder %s27, 0
      %p55 = por %p53, %p54
      %p56 = scmp.ne.s32.totalorder %s44, %s45
      %p57 = scmp.eq.s32.totalorder %s28, 1
      %p58 = por %p56, %p57
      %p60 = scmp.ne.s32.totalorder %s45, %s59
      %p61 = scmp.eq.s32.totalorder %s28, 0
      %p62 = por %p60, %p61
      %s63 = ssub.s32 %s29, %s41
      %s64 = ssub.s32 %s30, %s37
      %s65 = sor.u32 %s63, %s64
      %p66 = scmp.eq.s32.totalorder %s65, 0
      %s68 = sadd.s32 %s67, 1
      %s69 = scalar_select %p66, %s67, %s68
      %p72 = pneg %p66
      %p73 = scmp.eq.s32.totalorder %s22, 1
      %p74 = por %p72, %p73
      %p75 = scmp.ne.s32.totalorder %s67, %s70
      %p76 = scmp.eq.s32.totalorder %s22, 0
      %p77 = por %p75, %p76
      %p78 = scmp.ne.s32.totalorder %s67, %s70
      %p79 = scmp.eq.s32.totalorder %s27, 1
      %p80 = por %p78, %p79
      %p81 = scmp.ne.s32.totalorder %s70, %s71
      %p82 = scmp.eq.s32.totalorder %s27, 0
      %p83 = por %p81, %p82
      %p84 = scmp.ne.s32.totalorder %s70, %s71
      %p85 = scmp.eq.s32.totalorder %s28, 1
      %p86 = por %p84, %p85
      %p88 = scmp.ne.s32.totalorder %s71, %s87
      %p89 = scmp.eq.s32.totalorder %s28, 0
      %p90 = por %p88, %p89
      %s91 = ssub.s32 %s29, %s41
      %s92 = ssub.s32 %s30, %s37
      %s93 = sor.u32 %s91, %s92
      %p94 = scmp.eq.s32.totalorder %s93, 0
      %s96 = sadd.s32 %s95, 1
      %s97 = scalar_select %p94, %s95, %s96
      %p100 = pneg %p94
      %p101 = scmp.eq.s32.totalorder %s22, 1
      %p102 = por %p100, %p101
      %p103 = scmp.ne.s32.totalorder %s95, %s98
      %p104 = scmp.eq.s32.totalorder %s22, 0
      %p105 = por %p103, %p104
      %p106 = scmp.ne.s32.totalorder %s95, %s98
      %p107 = scmp.eq.s32.totalorder %s27, 1
      %p108 = por %p106, %p107
      %p109 = scmp.ne.s32.totalorder %s98, %s99
      %p110 = scmp.eq.s32.totalorder %s27, 0
      %p111 = por %p109, %p110
      %p112 = scmp.ne.s32.totalorder %s98, %s99
      %p113 = scmp.eq.s32.totalorder %s28, 1
      %p114 = por %p112, %p113
      %p116 = scmp.ne.s32.totalorder %s99, %s115
      %p117 = scmp.eq.s32.totalorder %s28, 0
      %p118 = por %p116, %p117
      %s120 = sadd.s32 %s119, 1
      %p123 = scmp.eq.s32.totalorder %s22, 1
      %p124 = scmp.ne.s32.totalorder %s119, %s121
      %p125 = scmp.eq.s32.totalorder %s22, 0
      %p126 = por %p124, %p125
      %p127 = scmp.ne.s32.totalorder %s119, %s121
      %p128 = scmp.eq.s32.totalorder %s27, 1
      %p129 = por %p127, %p128
      %p130 = scmp.ne.s32.totalorder %s121, %s122
      %p131 = scmp.eq.s32.totalorder %s27, 0
      %p132 = por %p130, %p131
      %p133 = scmp.ne.s32.totalorder %s121, %s122
      %p134 = scmp.eq.s32.totalorder %s28, 1
      %p135 = por %p133, %p134
      %p137 = scmp.ne.s32.totalorder %s122, %s136
      %p138 = scmp.eq.s32.totalorder %s28, 0
      %p139 = por %p137, %p138
      %s141 = sadd.s32 %s140, 1
      %p144 = scmp.eq.s32.totalorder %s22, 1
      %p145 = scmp.ne.s32.totalorder %s140, %s142
      %p146 = scmp.eq.s32.totalorder %s22, 0
      %p147 = por %p145, %p146
      %p148 = scmp.ne.s32.totalorder %s140, %s142
      %p149 = scmp.eq.s32.totalorder %s27, 1
      %p150 = por %p148, %p149
      %p151 = scmp.ne.s32.totalorder %s142, %s143
      %p152 = scmp.eq.s32.totalorder %s27, 0
      %p153 = por %p151, %p152
      %p154 = scmp.ne.s32.totalorder %s142, %s143
      %p155 = scmp.eq.s32.totalorder %s28, 1
      %p156 = por %p154, %p155
      %p158 = scmp.ne.s32.totalorder %s143, %s157
      %p159 = scmp.eq.s32.totalorder %s28, 0
      %p160 = por %p158, %p159
      %s161 = ssub.s32 %s29, %s41
      %p162 = scmp.eq.s32.totalorder %s161, 0
      %s164 = sadd.s32 %s163, 1
      %s165 = scalar_select %p162, %s163, %s164
      %p168 = pneg %p162
      %p169 = scmp.eq.s32.totalorder %s22, 1
      %p170 = por %p168, %p169
      %p171 = scmp.ne.s32.totalorder %s163, %s166
      %p172 = scmp.eq.s32.totalorder %s22, 0
      %p173 = por %p171, %p172
      %p174 = scmp.ne.s32.totalorder %s163, %s166
      %p175 = scmp.eq.s32.totalorder %s27, 1
      %p176 = por %p174, %p175
      %p177 = scmp.ne.s32.totalorder %s166, %s167
      %p178 = scmp.eq.s32.totalorder %s27, 0
      %p179 = por %p177, %p178
      %p180 = scmp.ne.s32.totalorder %s166, %s167
      %p181 = scmp.eq.s32.totalorder %s28, 1
      %p182 = por %p180, %p181
      %p184 = scmp.ne.s32.totalorder %s167, %s183
      %p185 = scmp.eq.s32.totalorder %s28, 0
      %p186 = por %p184, %p185
      %s187 = ssub.s32 %s29, %s41
      %s188 = ssub.s32 %s30, %s37
      %s189 = sor.u32 %s187, %s188
      %p190 = scmp.eq.s32.totalorder %s189, 0
      %s192 = sadd.s32 %s191, 1
      %s193 = scalar_select %p190, %s191, %s192
      %p196 = pneg %p190
      %p197 = scmp.eq.s32.totalorder %s22, 1
      %p198 = por %p196, %p197
      %p199 = scmp.ne.s32.totalorder %s191, %s194
      %p200 = scmp.eq.s32.totalorder %s22, 0
      %p201 = por %p199, %p200
      %p202 = scmp.ne.s32.totalorder %s191, %s194
      %p203 = scmp.eq.s32.totalorder %s27, 1
      %p204 = por %p202, %p203
      %p205 = scmp.ne.s32.totalorder %s194, %s195
      %p206 = scmp.eq.s32.totalorder %s27, 0
      %p207 = por %p205, %p206
      %p208 = scmp.ne.s32.totalorder %s194, %s195
      %p209 = scmp.eq.s32.totalorder %s28, 1
      %p210 = por %p208, %p209
      %p212 = scmp.ne.s32.totalorder %s195, %s211
      %p213 = scmp.eq.s32.totalorder %s28, 0
      %p214 = por %p212, %p213
      %s215 = ssub.s32 %s29, %s41
      %s216 = ssub.s32 %s30, %s37
      %s217 = sor.u32 %s215, %s216
      %p218 = scmp.eq.s32.totalorder %s217, 0
      %s220 = sadd.s32 %s219, 1
      %s221 = scalar_select %p218, %s219, %s220
      %p224 = pneg %p218
      %p225 = scmp.eq.s32.totalorder %s22, 1
      %p226 = por %p224, %p225
      %p227 = scmp.ne.s32.totalorder %s219, %s222
      %p228 = scmp.eq.s32.totalorder %s22, 0
      %p229 = por %p227, %p228
      %p230 = scmp.ne.s32.totalorder %s219, %s222
      %p231 = scmp.eq.s32.totalorder %s27, 1
      %p232 = por %p230, %p231
      %p233 = scmp.ne.s32.totalorder %s222, %s223
      %p234 = scmp.eq.s32.totalorder %s27, 0
      %p235 = por %p233, %p234
      %p236 = scmp.ne.s32.totalorder %s222, %s223
      %p237 = scmp.eq.s32.totalorder %s28, 1
      %p238 = por %p236, %p237
      %p240 = scmp.ne.s32.totalorder %s223, %s239
      %p241 = scmp.eq.s32.totalorder %s28, 0
      %p242 = por %p240, %p241
      %s243 = ssub.s32 %s29, %s41
      %s244 = ssub.s32 %s30, %s37
      %s245 = sor.u32 %s243, %s244
      %p246 = scmp.eq.s32.totalorder %s245, 0
      %s248 = sadd.s32 %s247, 1
      %s249 = scalar_select %p246, %s247, %s248
      %p252 = pneg %p246
      %p253 = scmp.eq.s32.totalorder %s22, 1
      %p254 = por %p252, %p253
      %p255 = scmp.ne.s32.totalorder %s247, %s250
      %p256 = scmp.eq.s32.totalorder %s22, 0
      %p257 = por %p255, %p256
      %p258 = scmp.ne.s32.totalorder %s247, %s250
      %p259 = scmp.eq.s32.totalorder %s27, 1
      %p260 = por %p258, %p259
      %p261 = scmp.ne.s32.totalorder %s250, %s251
      %p262 = scmp.eq.s32.totalorder %s27, 0
      %p263 = por %p261, %p262
      %p264 = scmp.ne.s32.totalorder %s250, %s251
      %p265 = scmp.eq.s32.totalorder %s28, 1
      %p266 = por %p264, %p265
      %p268 = scmp.ne.s32.totalorder %s251, %s267
      %p269 = scmp.eq.s32.totalorder %s28, 0
      %p270 = por %p268, %p269
      %p271 = scmp.le.s32.totalorder 1, %s22
      %p272 = scmp.lt.s32.totalorder %s22, 3
      %p273 = pnand %p271, %p272
      %p274 = pneg %p273
      // Predicated region
      $region9: #{tpu_custom_call.1} parent=5 // pred_check
        _
      $region10: #{tpu_custom_call.1} parent=5 // pred_check_branch
        %276 = sbr.rel (%p273) target = $region12
      $region11: #{tpu_custom_call.1} parent=5 // pred_region
        %s277 = ssub.s32 %s22, 1
        // Predicated region
        $region13: #{tpu_custom_call.1} parent=11 // pred_check
          %p278 = pneg %p55
        $region14: #{tpu_custom_call.1} parent=11 // pred_check_branch
          %280 = sbr.rel (%p278) target = $region16
        $region15: #{tpu_custom_call.1} parent=11 // pred_region
          %s282 = ssub.s32 16, 16
          %283 = vsyncadd [#allocation5], %s282
          %286 = dma.hbm_to_smem %s0, 16, [#allocation2], [#allocation5]
        $region16: #{tpu_custom_call.1} parent=11 // pred_fallthru
          _
        // Predicated region
        $region17: #{tpu_custom_call.1} parent=11 // pred_check
          %p287 = pneg %p132
        $region18: #{tpu_custom_call.1} parent=11 // pred_check_branch
          %289 = sbr.rel (%p287) target = $region20
        $region19: #{tpu_custom_call.1} parent=11 // pred_region
          %s291 = ssub.s32 64, 64
          %292 = vsyncadd [#allocation8], %s291
          %s294 = sshll.u32 [#allocation7], 4
          %s295 = int_to_ptr.vmem [resolvable:$true] %s294
          %297 = dma.hbm_to_vmem [thread:$0]  %s3, 64, %s295, [#allocation8]
        $region20: #{tpu_custom_call.1} parent=11 // pred_fallthru
          _
        // Predicated region
        $region21: #{tpu_custom_call.1} parent=11 // pred_check
          %p298 = pneg %p153
        $region22: #{tpu_custom_call.1} parent=11 // pred_check_branch
          %300 = sbr.rel (%p298) target = $region24
        $region23: #{tpu_custom_call.1} parent=11 // pred_region
          %s302 = ssub.s32 64, 64
          %303 = vsyncadd [#allocation8], %s302
          %s305 = sshll.u32 [#allocation9], 4
          %s306 = int_to_ptr.vmem [resolvable:$true] %s305
          %308 = dma.hbm_to_vmem [thread:$0]  %s4, 64, %s306, [#allocation8]
        $region24: #{tpu_custom_call.1} parent=11 // pred_fallthru
          _
      $region12: #{tpu_custom_call.1} parent=5 // pred_fallthru
        _
      %p309 = scmp.lt.s32.totalorder %s22, 2
      // Predicated region
      $region25: #{tpu_custom_call.1} parent=5 // pred_check
        %p310 = pneg %p309
      $region26: #{tpu_custom_call.1} parent=5 // pred_check_branch
        %312 = sbr.rel (%p310) target = $region28
      $region27: #{tpu_custom_call.1} parent=5 // pred_region
        // Predicated region
        $region29: #{tpu_custom_call.1} parent=27 // pred_check
          %p313 = pneg %p77
        $region30: #{tpu_custom_call.1} parent=27 // pred_check_branch
          %315 = sbr.rel (%p313) target = $region32
        $region31: #{tpu_custom_call.1} parent=27 // pred_region
          %s316 = smul.u32 2, %s30
          %p317 = scmp.lt.s32.totalorder %s29, 1
          %s318 = scalar_select %p317, %s29, 1
          %p319 = scmp.lt.s32.totalorder %s316, 1
          %s320 = scalar_select %p319, %s316, 1
          %s321 = smul.addr %s318, 2
          %s322 = sadd.s32 %s320, %s321
          %s323 = smul.addr %s322, 2
          %s324 = scalar_lea.vmem %s1, %s323
          %s325 = smul.u32 2, %s30
        $region32: #{tpu_custom_call.1} parent=27 // pred_fallthru
          _
        // Predicated region
        $region33: #{tpu_custom_call.1} parent=27 // pred_check
          %p326 = pneg %p105
        $region34: #{tpu_custom_call.1} parent=27 // pred_check_branch
          %328 = sbr.rel (%p326) target = $region36
        $region35: #{tpu_custom_call.1} parent=27 // pred_region
          %s329 = sand.u32 %s95, 1
          %s330 = scalar_lea.sflag [#allocation3], %s329
          %s331 = sand.u32 %s95, 1
          %s332 = smul.addr %s331, 4
          %s333 = scalar_lea.vmem [#allocation6], %s332
          %s334 = smul.u32 2, %s30
          %s336 = ssub.s32 64, 64
          %337 = vsyncadd %s330, %s336
          %s338 = smul.addr %s29, 2
          %s339 = sadd.s32 %s334, %s338
          %s340 = smul.addr %s339, 32
          %s341 = scalar_lea.hbm %s2, %s340
          %s343 = sshll.u32 %s333, 4
          %s344 = int_to_ptr.vmem [resolvable:$true] %s343
          %346 = dma.hbm_to_vmem [thread:$0]  %s341, 64, %s344, %s330
        $region36: #{tpu_custom_call.1} parent=27 // pred_fallthru
          _
        // Predicated region
        $region37: #{tpu_custom_call.1} parent=27 // pred_check
          %p347 = pneg %p173
        $region38: #{tpu_custom_call.1} parent=27 // pred_check_branch
          %349 = sbr.rel (%p347) target = $region40
        $region39: #{tpu_custom_call.1} parent=27 // pred_region
          %p350 = scmp.lt.s32.totalorder %s29, 1
          %s351 = scalar_select %p350, %s29, 1
          %s352 = smul.addr %s351, 4
          %s353 = scalar_lea.vmem %s5, %s352
        $region40: #{tpu_custom_call.1} parent=27 // pred_fallthru
          _
        // Predicated region
        $region41: #{tpu_custom_call.1} parent=27 // pred_check
          %p354 = pneg %p201
        $region42: #{tpu_custom_call.1} parent=27 // pred_check_branch
          %356 = sbr.rel (%p354) target = $region44
        $region43: #{tpu_custom_call.1} parent=27 // pred_region
          %s357 = smul.u32 2, %s30
          %p358 = scmp.lt.s32.totalorder %s29, 1
          %s359 = scalar_select %p358, %s29, 1
          %p360 = scmp.lt.s32.totalorder %s357, 1
          %s361 = scalar_select %p360, %s357, 1
          %s362 = smul.addr %s359, 2
          %s363 = sadd.s32 %s361, %s362
          %s364 = smul.addr %s363, 2
          %s365 = scalar_lea.vmem %s6, %s364
          %s366 = smul.u32 2, %s30
        $region44: #{tpu_custom_call.1} parent=27 // pred_fallthru
          _
        // Predicated region
        $region45: #{tpu_custom_call.1} parent=27 // pred_check
          %p367 = pneg %p229
        $region46: #{tpu_custom_call.1} parent=27 // pred_check_branch
          %369 = sbr.rel (%p367) target = $region48
        $region47: #{tpu_custom_call.1} parent=27 // pred_region
          %s370 = smul.u32 2, %s30
          %p371 = scmp.lt.s32.totalorder %s29, 1
          %s372 = scalar_select %p371, %s29, 1
          %p373 = scmp.lt.s32.totalorder %s370, 1
          %s374 = scalar_select %p373, %s370, 1
          %s375 = smul.addr %s372, 2
          %s376 = sadd.s32 %s374, %s375
          %s377 = scalar_lea.vmem %s7, %s376
          %s378 = smul.u32 2, %s30
        $region48: #{tpu_custom_call.1} parent=27 // pred_fallthru
          _
      $region28: #{tpu_custom_call.1} parent=5 // pred_fallthru
        _
      %p379 = scmp.le.s32.totalorder 1, %s22
      %p380 = scmp.lt.s32.totalorder %s22, 3
      %p381 = pnand %p379, %p380
      %p382 = pneg %p381
      // Predicated region
      $region49: #{tpu_custom_call.1} parent=5 // pred_check
        _
      $region50: #{tpu_custom_call.1} parent=5 // pred_check_branch
        %384 = sbr.rel (%p381) target = $region52
      $region51: #{tpu_custom_call.1} parent=5 // pred_region
        %s385 = ssub.s32 %s22, 1
        // Predicated region
        $region53: #{tpu_custom_call.1} parent=51 // pred_check
          %p386 = pneg %p55
        $region54: #{tpu_custom_call.1} parent=51 // pred_check_branch
          %388 = sbr.rel (%p386) target = $region56
        $region55: #{tpu_custom_call.1} parent=51 // pred_region
          %389 = dma.done [#allocation5], 16
        $region56: #{tpu_custom_call.1} parent=51 // pred_fallthru
          _
        %s390 = sand.u32 %s98, 1
        %s391 = scalar_lea.sflag [#allocation3], %s390
        %s392 = sand.u32 %s98, 1
        %s393 = smul.addr %s392, 4
        %s394 = scalar_lea.vmem [#allocation6], %s393
        // Predicated region
        $region57: #{tpu_custom_call.1} parent=51 // pred_check
          %p395 = pneg %p111
        $region58: #{tpu_custom_call.1} parent=51 // pred_check_branch
          %397 = sbr.rel (%p395) target = $region60
        $region59: #{tpu_custom_call.1} parent=51 // pred_region
          %398 = dma.done %s391, 64
        $region60: #{tpu_custom_call.1} parent=51 // pred_fallthru
          _
        // Predicated region
        $region61: #{tpu_custom_call.1} parent=51 // pred_check
          %p399 = pneg %p132
        $region62: #{tpu_custom_call.1} parent=51 // pred_check_branch
          %401 = sbr.rel (%p399) target = $region64
        $region63: #{tpu_custom_call.1} parent=51 // pred_region
          %402 = dma.done [#allocation8], 64
        $region64: #{tpu_custom_call.1} parent=51 // pred_fallthru
          _
        // Predicated region
        $region65: #{tpu_custom_call.1} parent=51 // pred_check
          %p403 = pneg %p153
        $region66: #{tpu_custom_call.1} parent=51 // pred_check_branch
          %405 = sbr.rel (%p403) target = $region68
        $region67: #{tpu_custom_call.1} parent=51 // pred_region
          %406 = dma.done [#allocation8], 64
        $region68: #{tpu_custom_call.1} parent=51 // pred_fallthru
          _
        %407 = sfence
        %p408 = pneg %p55
        %p409 = pneg %p52
        %s410 = smul.u32 2, %s32
        %p411 = scmp.lt.s32.totalorder %s31, 1
        %s412 = scalar_select %p411, %s31, 1
        %p413 = scmp.lt.s32.totalorder %s410, 1
        %s414 = scalar_select %p413, %s410, 1
        %s415 = smul.addr %s412, 2
        %s416 = sadd.s32 %s414, %s415
        %s417 = smul.addr %s416, 2
        %s418 = scalar_lea.vmem %s1, %s417
        %p419 = pneg %p83
        %p420 = pneg %p80
        %s421 = sand.u32 %s98, 1
        %s422 = scalar_lea.sflag [#allocation3], %s421
        %s423 = sand.u32 %s98, 1
        %s424 = smul.addr %s423, 4
        %s425 = scalar_lea.vmem [#allocation6], %s424
        %p426 = pneg %p111
        %p427 = pneg %p108
        %p428 = pneg %p132
        %p429 = pneg %p129
        %p430 = pneg %p153
        %p431 = pneg %p150
        %p432 = scmp.lt.s32.totalorder %s31, 1
        %s433 = scalar_select %p432, %s31, 1
        %s434 = smul.addr %s433, 4
        %s435 = scalar_lea.vmem %s5, %s434
        %p436 = pneg %p179
        %p437 = pneg %p176
        %s438 = smul.u32 2, %s32
        %p439 = scmp.lt.s32.totalorder %s31, 1
        %s440 = scalar_select %p439, %s31, 1
        %p441 = scmp.lt.s32.totalorder %s438, 1
        %s442 = scalar_select %p441, %s438, 1
        %s443 = smul.addr %s440, 2
        %s444 = sadd.s32 %s442, %s443
        %s445 = smul.addr %s444, 2
        %s446 = scalar_lea.vmem %s6, %s445
        %p447 = pneg %p207
        %p448 = pneg %p204
        %s449 = smul.u32 2, %s32
        %p450 = scmp.lt.s32.totalorder %s31, 1
        %s451 = scalar_select %p450, %s31, 1
        %p452 = scmp.lt.s32.totalorder %s449, 1
        %s453 = scalar_select %p452, %s449, 1
        %s454 = smul.addr %s451, 2
        %s455 = sadd.s32 %s453, %s454
        %s456 = scalar_lea.vmem %s7, %s455
        %p457 = pneg %p235
        %p458 = pneg %p232
        %p459 = pneg %p263
        %p460 = pneg %p260
        %s461 = sand.u32 %s250, 1
        %s462 = scalar_lea.sflag [#allocation4], %s461
        %s463 = sand.u32 %s250, 1
        %s464 = smul.addr %s463, 8
        %s465 = scalar_lea.vmem [#allocation10], %s464
        %s466 = smul.u32 2, %s32
        %p467 = scmp.lt.s32.totalorder %s31, 1
        %s468 = scalar_select %p467, %s31, 1
        %p469 = scmp.lt.s32.totalorder %s466, 1
        %s470 = scalar_select %p469, %s466, 1
        %s471 = smul.addr %s468, 2
        %s472 = sadd.s32 %s470, %s471
        %s473 = smul.addr %s472, 2
        %s474 = scalar_lea.vmem %s1, %s473
        %s475 = smul.u32 2, %s32
        %s476 = smul.u32 2, %s32
        %p477 = scmp.lt.s32.totalorder %s31, 1
        %s478 = scalar_select %p477, %s31, 1
        %s479 = smul.addr %s478, 4
        %s480 = scalar_lea.vmem %s5, %s479
        %s481 = smul.u32 2, %s32
        %p482 = scmp.lt.s32.totalorder %s31, 1
        %s483 = scalar_select %p482, %s31, 1
        %p484 = scmp.lt.s32.totalorder %s481, 1
        %s485 = scalar_select %p484, %s481, 1
        %s486 = smul.addr %s483, 2
        %s487 = sadd.s32 %s485, %s486
        %s488 = smul.addr %s487, 2
        %s489 = scalar_lea.vmem %s6, %s488
        %s490 = smul.u32 2, %s32
        %s491 = smul.u32 2, %s32
        %p492 = scmp.lt.s32.totalorder %s31, 1
        %s493 = scalar_select %p492, %s31, 1
        %p494 = scmp.lt.s32.totalorder %s491, 1
        %s495 = scalar_select %p494, %s491, 1
        %s496 = smul.addr %s493, 2
        %s497 = sadd.s32 %s495, %s496
        %s498 = scalar_lea.vmem %s7, %s497
        %s499 = smul.u32 2, %s32
        %s500 = smul.u32 2, %s32
        %v501 = vld [vmem:[%s474] sm:$0xf]
        %v502 = vunpack.c.l.bf16 %v501
        %v503 = vld [vmem:[%s394] sm:$0xf]
        %v504 = vunpack.c.l.bf16 %v503
        %v505 = vld [vmem:[#allocation7] sm:$0xf]
        %v506 = vld [vmem:[#allocation9] sm:$0xf]
        %v508 = vcombine.high %v504, %v504
        %vm509 = vcmask 31744
        %v511 = vsel %vm509, %v506, 0
        %vm513 = vcmask 1043456
        %v514 = vsel %vm513, %v504, 0
        %v516 = vsel %vm513, %v508, 0
        %518 = vmatprep.subr.mxu0 0.0
        %519 = vmatpush1.msra.mxu0 0.0
        %520 = vmatprep.subr.mxu0 0.0
        %521 = vmatpush1.msra.mxu0 0.0
        %522 = vmatprep.subr.mxu0 0.0
        %523 = vmatpush1.msra.mxu0 0.0
        %524 = vmatprep.subr.mxu0 0.0
        %525 = vmatpush1.msra.mxu0 0.0
        %526 = vmatprep.subr.mxu0 0.0
        %527 = vmatpush1.msra.mxu0 0.0
        %528 = vmatprep.subr.mxu0 0.0
        %529 = vmatpush1.msra.mxu0 0.0
        %530 = vmatprep.subr.mxu0 0.0
        %531 = vmatpush1.msra.mxu0 0.0
        %532 = vmatprep.subr.mxu0 0.0
        %533 = vmatpush1.msra.mxu0 0.0
        %534 = vmatprep.subr.mxu0 0.0
        %535 = vmatpush1.msra.mxu0 0.0
        %536 = vmatprep.subr.mxu0 0.0
        %537 = vmatpush1.msra.mxu0 0.0
        %538 = vmatprep.subr.mxu0 0.0
        %539 = vmatpush1.msra.mxu0 0.0
        %540 = vmatprep.subr.mxu0 0.0
        %541 = vmatpush1.msra.mxu0 0.0
        %542 = vmatprep.subr.mxu0 0.0
        %543 = vmatpush1.msra.mxu0 0.0
        %544 = vmatprep.subr.mxu0 0.0
        %545 = vmatpush1.msra.mxu0 0.0
        %546 = vmatprep.subr.mxu0 0.0
        %547 = vmatpush1.msra.mxu0 0.0
        %548 = vmatprep.subr.mxu0 %v516
        %549 = vmatpush1.msra.mxu0 %v514
        %550 = vmatprep.subr.mxu0 0.0
        %551 = vmatpush2.msra.mxu0 0.0
        %552 = vmatprep.subr.mxu0 0.0
        %553 = vmatpush2.msra.mxu0 0.0
        %554 = vmatprep.subr.mxu0 0.0
        %555 = vmatpush2.msra.mxu0 0.0
        %556 = vmatprep.subr.mxu0 0.0
        %557 = vmatpush2.msra.mxu0 0.0
        %558 = vmatprep.subr.mxu0 0.0
        %559 = vmatpush2.msra.mxu0 0.0
        %560 = vmatprep.subr.mxu0 0.0
        %561 = vmatpush2.msra.mxu0 0.0
        %562 = vmatprep.subr.mxu0 0.0
        %563 = vmatpush2.msra.mxu0 0.0
        %564 = vmatprep.subr.mxu0 0.0
        %565 = vmatpush2.msra.mxu0 0.0
        %566 = vmatprep.subr.mxu0 0.0
        %567 = vmatpush2.msra.mxu0 0.0
        %568 = vmatprep.subr.mxu0 0.0
        %569 = vmatpush2.msra.mxu0 0.0
        %570 = vmatprep.subr.mxu0 0.0
        %571 = vmatpush2.msra.mxu0 0.0
        %572 = vmatprep.subr.mxu0 0.0
        %573 = vmatpush2.msra.mxu0 0.0
        %574 = vmatprep.subr.mxu0 0.0
        %575 = vmatpush2.msra.mxu0 0.0
        %576 = vmatprep.subr.mxu0 0.0
        %577 = vmatpush2.msra.mxu0 0.0
        %578 = vmatprep.subr.mxu0 0.0
        %579 = vmatpush2.msra.mxu0 0.0
        %580 = vmatprep.subr.mxu0 0.0
        %581 = vmatpush2.msra.mxu0 0.0
        %582 = vmatprep.mubr.f32.mxu0 0.0
        %583 = vmatmul.mubr.f32.gmra.mxu0 %v511
        %v584 = vpop.f32.mrf.mxu0
        %v585 = vadd.f32 0.0, %v584
        %v586 = vpop.f32.mrf.mxu0
        %v587 = vadd.f32 0.0, %v586
        %588 = vdwg.mxu0
        %v590 = vcombine.high %v502, %v502
        %v592 = vsel %vm509, %v505, 0
        %v594 = vsel %vm513, %v502, 0
        %v596 = vsel %vm513, %v590, 0
        %598 = vmatprep.subr.mxu0 0.0
        %599 = vmatpush1.msra.mxu0 0.0
        %600 = vmatprep.subr.mxu0 0.0
        %601 = vmatpush1.msra.mxu0 0.0
        %602 = vmatprep.subr.mxu0 0.0
        %603 = vmatpush1.msra.mxu0 0.0
        %604 = vmatprep.subr.mxu0 0.0
        %605 = vmatpush1.msra.mxu0 0.0
        %606 = vmatprep.subr.mxu0 0.0
        %607 = vmatpush1.msra.mxu0 0.0
        %608 = vmatprep.subr.mxu0 0.0
        %609 = vmatpush1.msra.mxu0 0.0
        %610 = vmatprep.subr.mxu0 0.0
        %611 = vmatpush1.msra.mxu0 0.0
        %612 = vmatprep.subr.mxu0 0.0
        %613 = vmatpush1.msra.mxu0 0.0
        %614 = vmatprep.subr.mxu0 0.0
        %615 = vmatpush1.msra.mxu0 0.0
        %616 = vmatprep.subr.mxu0 0.0
        %617 = vmatpush1.msra.mxu0 0.0
        %618 = vmatprep.subr.mxu0 0.0
        %619 = vmatpush1.msra.mxu0 0.0
        %620 = vmatprep.subr.mxu0 0.0
        %621 = vmatpush1.msra.mxu0 0.0
        %622 = vmatprep.subr.mxu0 0.0
        %623 = vmatpush1.msra.mxu0 0.0
        %624 = vmatprep.subr.mxu0 0.0
        %625 = vmatpush1.msra.mxu0 0.0
        %626 = vmatprep.subr.mxu0 0.0
        %627 = vmatpush1.msra.mxu0 0.0
        %628 = vmatprep.subr.mxu0 %v596
        %629 = vmatpush1.msra.mxu0 %v594
        %630 = vmatprep.subr.mxu0 0.0
        %631 = vmatpush2.msra.mxu0 0.0
        %632 = vmatprep.subr.mxu0 0.0
        %633 = vmatpush2.msra.mxu0 0.0
        %634 = vmatprep.subr.mxu0 0.0
        %635 = vmatpush2.msra.mxu0 0.0
        %636 = vmatprep.subr.mxu0 0.0
        %637 = vmatpush2.msra.mxu0 0.0
        %638 = vmatprep.subr.mxu0 0.0
        %639 = vmatpush2.msra.mxu0 0.0
        %640 = vmatprep.subr.mxu0 0.0
        %641 = vmatpush2.msra.mxu0 0.0
        %642 = vmatprep.subr.mxu0 0.0
        %643 = vmatpush2.msra.mxu0 0.0
        %644 = vmatprep.subr.mxu0 0.0
        %645 = vmatpush2.msra.mxu0 0.0
        %646 = vmatprep.subr.mxu0 0.0
        %647 = vmatpush2.msra.mxu0 0.0
        %648 = vmatprep.subr.mxu0 0.0
        %649 = vmatpush2.msra.mxu0 0.0
        %650 = vmatprep.subr.mxu0 0.0
        %651 = vmatpush2.msra.mxu0 0.0
        %652 = vmatprep.subr.mxu0 0.0
        %653 = vmatpush2.msra.mxu0 0.0
        %654 = vmatprep.subr.mxu0 0.0
        %655 = vmatpush2.msra.mxu0 0.0
        %656 = vmatprep.subr.mxu0 0.0
        %657 = vmatpush2.msra.mxu0 0.0
        %658 = vmatprep.subr.mxu0 0.0
        %659 = vmatpush2.msra.mxu0 0.0
        %660 = vmatprep.subr.mxu0 0.0
        %661 = vmatpush2.msra.mxu0 0.0
        %662 = vmatprep.mubr.f32.mxu0 0.0
        %663 = vmatmul.mubr.f32.gmra.mxu0 %v592
        %v664 = vpop.f32.mrf.mxu0
        %v665 = vadd.f32 %v585, %v664
        %v666 = vpop.f32.mrf.mxu0
        %v667 = vadd.f32 %v587, %v666
        %668 = vdwg.mxu0
        %s669 = sld [smem:[#allocation2 + %s31]]
        %v670 = vstv %s669
        %v671 = vmul.f32 %v502, %v670
        %v674 = vcombine.low %v665, %v667
        %v676 = vadd.f32 %v671, %v674
        %v677 = vld [vmem:[%s480] sm:$0xf]
        %679 = vset.pattern.permute.xlu0 0
        %680 = vperm.xlu0 %679, %v677
        %v681 = vpop.permute.xlu0 %680
        %v683 = vunpack.c.l.s4 839922192
        %v684 = vunpack.c.0.s8 %v683
        %v685 = vlaneseq
        %v686 = vshrl.u32 %v685, 7
        %v687 = vsub.s32 %v684, %v686
        %v688 = vrot.slane %v681, %v687
        %v690 = vadd.f32 %v676, %v688
        %v691 = vld [vmem:[%s498] sm:$0x3]
        %v692 = vld [vmem:[%s489] sm:$0xf]
        %v693 = vunpack.c.l.bf16 %v692
        %v695 = vlaneseq
        %v696 = vshrl.u32 %v695, 7
        %v697 = vsub.s32 0, %v696
        %v698 = vrot.slane %v691, %v697
        %v699 = vlaneseq
        %v700 = vshrl.u32 %v699, 7
        %v701 = vsub.s32 1, %v700
        %v702 = vrot.slane %v691, %v701
        %v703 = vcombine.low %v698, %v702
        %v705 = vmul.f32 %v693, %v703
        %v706 = vsub.f32 1.0, %v691
        %v708 = vlaneseq
        %v709 = vshrl.u32 %v708, 7
        %v710 = vsub.s32 0, %v709
        %v711 = vrot.slane %v706, %v710
        %v712 = vlaneseq
        %v713 = vshrl.u32 %v712, 7
        %v714 = vsub.s32 1, %v713
        %v715 = vrot.slane %v706, %v714
        %v719 = vcombine.high %v690, %v690
        %v721 = vmul.f32 %v711, %v690
        %v722 = vmul.f32 %v715, %v719
        %v725 = vcombine.low %v721, %v722
        %v727 = vadd.f32 %v705, %v725
        %728 = vst [vmem:[%s465] sm:$0xff] %v727
        %s729 = sand.u32 %s250, 1
        %s730 = scalar_lea.sflag [#allocation4], %s729
        %s731 = sand.u32 %s250, 1
        %s732 = smul.addr %s731, 8
        %s733 = scalar_lea.vmem [#allocation10], %s732
        // Predicated region
        $region69: #{tpu_custom_call.1} parent=51 // pred_check
          %p734 = pneg %p260
        $region70: #{tpu_custom_call.1} parent=51 // pred_check_branch
          %736 = sbr.rel (%p734) target = $region72
        $region71: #{tpu_custom_call.1} parent=51 // pred_region
          %s737 = smul.u32 2, %s32
          %s739 = ssub.s32 128, 128
          %740 = vsyncadd %s730, %s739
          %s741 = smul.addr %s31, 2
          %s742 = sadd.s32 %s737, %s741
          %s743 = smul.addr %s742, 64
          %s744 = scalar_lea.hbm %s8, %s743
          %s746 = sshll.u32 %s733, 4
          %s747 = int_to_ptr.vmem [resolvable:$true] %s746
          %749 = dma.vmem_to_hbm [thread:$0]  %s747, 128, %s744, %s730
        $region72: #{tpu_custom_call.1} parent=51 // pred_fallthru
          _
      $region52: #{tpu_custom_call.1} parent=5 // pred_fallthru
        _
      %p750 = scmp.le.s32.totalorder 2, %s22
      // Predicated region
      $region73: #{tpu_custom_call.1} parent=5 // pred_check
        %p751 = pneg %p750
      $region74: #{tpu_custom_call.1} parent=5 // pred_check_branch
        %753 = sbr.rel (%p751) target = $region76
      $region75: #{tpu_custom_call.1} parent=5 // pred_region
        %s754 = ssub.s32 %s22, 2
        // Predicated region
        $region77: #{tpu_custom_call.1} parent=75 // pred_check
          %p755 = pneg %p266
        $region78: #{tpu_custom_call.1} parent=75 // pred_check_branch
          %757 = sbr.rel (%p755) target = $region80
        $region79: #{tpu_custom_call.1} parent=75 // pred_region
          %s758 = sand.u32 %s251, 1
          %s759 = scalar_lea.sflag [#allocation4], %s758
          %s760 = sand.u32 %s251, 1
          %s761 = smul.addr %s760, 8
          %s762 = scalar_lea.vmem [#allocation10], %s761
          %763 = dma.done %s759, 128
        $region80: #{tpu_custom_call.1} parent=75 // pred_fallthru
          _
      $region76: #{tpu_custom_call.1} parent=5 // pred_fallthru
        _
    $region6: #{tpu_custom_call.1} parent=1 // loop_footer
      %s26 = sadd.s32 1, %s22
    $region7: #{tpu_custom_call.1} parent=1 // loop_footer_branch
      %21 = sbr.rel target = $region3
    $region8: #{tpu_custom_call.1} parent=1 // loop_exit
      _
    %764 = vsyncpa [#allocation3], 1
    %s765 = scalar_lea.sflag [#allocation3], 1
    %766 = vsyncpa %s765, 1
    %767 = vsyncpa [#allocation8], 1
    %768 = vsyncpa [#allocation4], 1
    %s769 = scalar_lea.sflag [#allocation4], 1
    %770 = vsyncpa %s769, 1
    %771 = vsyncpa [#allocation5], 1
    %s772 = scalar_lea.sflag [#allocation5], 1
    %773 = vsyncpa %s772, 1

</llo_original>
